<compile_context>
chip_gen: v6e
topology: v6e:2x2x1
jax: 0.10.0
libtpu: 0.0.40
codegen_flags: <defaults>
</compile_context>

<pallas_src>
import functools

import jax
import jax.numpy as jnp
import numpy as np
from jax.experimental import pallas as pl
from jax.experimental.pallas import tpu as pltpu

SUBLANE = 8


def _cdiv(a, b):
    return (a + b - 1) // b


def _round_up(x, m):
    return ((x + m - 1) // m) * m


# ----------------------------- Pallas kernel --------------------------------
def critic_kernel(state_ref, action_ref,
                  w1_ref, b1_ref,
                  w2s_ref, w2a_ref, b2_ref,
                  w3_ref, b3_ref,
                  out_ref):
    wdt = w1_ref.dtype  # weight dtype (bf16 production / f32 validation)

    # fc1 + ReLU.  K = state_size (33): full-extent block; Mosaic masks/pads
    # the ragged contraction dim internally.
    h1 = jnp.dot(state_ref[...].astype(wdt), w1_ref[...],
                 preferred_element_type=jnp.float32) + b1_ref[...]
    h1 = jnp.maximum(h1, 0.0)

    # fc2 over concat(h1, action) + ReLU, realized as an exact split matmul.
    # The action part (K = 4) stays in f32 — tiny and exact.
    h2 = (jnp.dot(h1.astype(wdt), w2s_ref[...],
                  preferred_element_type=jnp.float32)
          + jnp.dot(action_ref[...], w2a_ref[...],
                    preferred_element_type=jnp.float32)
          + b2_ref[...])
    h2 = jnp.maximum(h2, 0.0)

    # fc3: single real output lane.  Broadcast multiply (VPU) + lane reduce
    # (XLU) instead of a mostly-zero MXU matmul; stores a (tb, 1) block.
    q = jnp.sum(h2 * w3_ref[...], axis=-1, keepdims=True) + b3_ref[...]
    out_ref[...] = q.astype(out_ref.dtype)


# --------------------------- parameter preparation ---------------------------
def init_critic_params(key, state_size, action_size, fc1_size=256, fc2_size=128):
    """Deterministic init mirroring the PyTorch module's reset_parameters().

    nn.Linear weight shape is (out, in); hidden_init uses size(0) (=out) for
    the limit, exactly as in the reference code.  Biases keep PyTorch's
    default Linear init range (+-1/sqrt(in_features)).
    """
    ks = jax.random.split(key, 6)

    def uni(k, shape, lim):
        return jax.random.uniform(k, shape, jnp.float32, minval=-lim, maxval=lim)

    w1 = uni(ks[0], (fc1_size, state_size), 1.0 / np.sqrt(fc1_size))
    b1 = uni(ks[1], (1, fc1_size), 1.0 / np.sqrt(state_size))

    w2 = uni(ks[2], (fc2_size, fc1_size + action_size), 1.0 / np.sqrt(fc2_size))
    b2 = uni(ks[3], (1, fc2_size), 1.0 / np.sqrt(fc1_size + action_size))

    w3 = uni(ks[4], (1, fc2_size), 3e-3)
    b3 = uni(ks[5], (1, 1), 1.0 / np.sqrt(fc2_size))
    return (w1, b1, w2, b2, w3, b3)


def prepare_critic_params(raw_params, weights_dtype=jnp.bfloat16):
    """Pre-transpose + split fc2; cast the big matmul weights to weights_dtype.

    bf16 is the production default (MXU-native, halves resident weight bytes);
    activations are cast to match inside the kernel, accumulation stays f32.
    The small action slice of fc2, the fc3 row and all biases stay f32.
    """
    w1, b1, w2, b2, w3, b3 = raw_params
    fc1 = w1.shape[0]

    w1t = w1.T.astype(weights_dtype)                 # [S, fc1]
    w2st = w2[:, :fc1].T.astype(weights_dtype)       # [fc1, fc2]
    w2at = w2[:, fc1:].T.astype(jnp.float32)         # [A, fc2]
    w3row = w3.astype(jnp.float32)                   # [1, fc2]
    b1p = b1.reshape(1, -1).astype(jnp.float32)      # [1, fc1]
    b2p = b2.reshape(1, -1).astype(jnp.float32)      # [1, fc2]
    b3p = b3.reshape(1, 1).astype(jnp.float32)       # [1, 1]
    return (w1t, b1p, w2st, w2at, b2p, w3row, b3p)


# ------------------------------ tiling policy ---------------------------------
def _choose_batch_tile(B, block_batch):
    """Pick a batch tile that is always a legal block shape and, when the work
    fits in <= 2 tiles, splits it ~evenly across two tiles (v7x megacore)."""
    if B <= SUBLANE:
        return B                                  # full-extent block, always legal
    max_tb = (B // SUBLANE) * SUBLANE             # largest multiple-of-8 tile <= B
    tb = max(SUBLANE, min(block_batch, max_tb))
    if _cdiv(B, tb) <= 2:
        tb = max(SUBLANE, min(_round_up(_cdiv(B, 2), SUBLANE), max_tb))
    return tb


# ------------------------------ forward wrapper -------------------------------
@functools.partial(jax.jit, static_argnames=("block_batch",))
def critic_forward(state, action, params, *, block_batch=1024):
    """Critic forward: state [B, S], action [B, A] -> [B, 1] (float32)."""
    w1t, b1, w2st, w2at, b2, w3row, b3 = params
    B, S = state.shape
    A = action.shape[1]
    fc1 = w1t.shape[1]
    fc2 = w2st.shape[1]

    tb = _choose_batch_tile(B, block_batch)
    grid = (_cdiv(B, tb),)

    batch_tile = lambda i: (i, 0)
    resident = lambda i: (0, 0)

    flops = 2 * B * (S * fc1 + (fc1 + A) * fc2 + fc2)
    bytes_accessed = (
        state.size * state.dtype.itemsize
        + action.size * action.dtype.itemsize
        + sum(int(p.size) * p.dtype.itemsize for p in params)
        + B * 4)

    out = pl.pallas_call(
        critic_kernel,
        out_shape=jax.ShapeDtypeStruct((B, 1), jnp.float32),
        grid=grid,
        in_specs=[
            pl.BlockSpec((tb, S), batch_tile),     # state tile (unpadded K=33)
            pl.BlockSpec((tb, A), batch_tile),     # action tile (unpadded K=4)
            pl.BlockSpec((S, fc1), resident),      # w1^T        (VMEM-resident)
            pl.BlockSpec((1, fc1), resident),      # b1
            pl.BlockSpec((fc1, fc2), resident),    # w2 (state part)^T
            pl.BlockSpec((A, fc2), resident),      # w2 (action part)^T
            pl.BlockSpec((1, fc2), resident),      # b2
            pl.BlockSpec((1, fc2), resident),      # w3 row
            pl.BlockSpec((1, 1), resident),        # b3
        ],
        out_specs=pl.BlockSpec((tb, 1), batch_tile),
        compiler_params=pltpu.CompilerParams(
            dimension_semantics=("parallel",)),
        cost_estimate=pl.CostEstimate(
            flops=flops, transcendentals=0, bytes_accessed=bytes_accessed),
    )(state, action, w1t, b1, w2st, w2at, b2, w3row, b3)

    return out


# ----------------------------- reference (JAX) -------------------------------
def critic_reference(state, action, raw_params):
    w1, b1, w2, b2, w3, b3 = raw_params
    x = jnp.maximum(state @ w1.T + b1, 0.0)
    x = jnp.concatenate([x, action], axis=1)
    x = jnp.maximum(x @ w2.T + b2, 0.0)
    return x @ w3.T + b3


# ----------------------------------- main ------------------------------------
if __name__ == "__main__":
    key = jax.random.PRNGKey(0)
    k_state, k_action, k_params, k_big = jax.random.split(key, 4)

    B, STATE_SIZE, ACTION_SIZE = 8, 33, 4   # small shapes consistent w/ module
    FC1, FC2 = 256, 128

    state = jax.random.normal(k_state, (B, STATE_SIZE), jnp.float32)
    action = jax.random.normal(k_action, (B, ACTION_SIZE), jnp.float32)

    raw_params = init_critic_params(k_params, STATE_SIZE, ACTION_SIZE, FC1, FC2)
    ref = critic_reference(state, action, raw_params)

    # Exact float32 validation path.
    params_f32 = prepare_critic_params(raw_params, weights_dtype=jnp.float32)
    out = jax.block_until_ready(critic_forward(state, action, params_f32))
    np.testing.assert_allclose(np.asarray(out), np.asarray(ref),
                               rtol=1e-5, atol=1e-5)

    # Larger batch: exercises the balanced two-tile grid with a partial last
    # block (B=300 -> tiles of 152 + 148 rows, no wrapper-side batch padding).
    B2 = 300
    kb1, kb2 = jax.random.split(k_big)
    state2 = jax.random.normal(kb1, (B2, STATE_SIZE), jnp.float32)
    action2 = jax.random.normal(kb2, (B2, ACTION_SIZE), jnp.float32)
    out2 = jax.block_until_ready(critic_forward(state2, action2, params_f32))
    ref2 = critic_reference(state2, action2, raw_params)
    np.testing.assert_allclose(np.asarray(out2), np.asarray(ref2),
                               rtol=1e-5, atol=1e-5)

    # Production default: bf16 weights + bf16 activation casts, f32 accumulation
    # (intentionally approximate — expected ~1e-2 relative error on Q values).
    params_bf16 = prepare_critic_params(raw_params)
    out_bf16 = jax.block_until_ready(critic_forward(state, action, params_bf16))
    np.testing.assert_allclose(np.asarray(out_bf16), np.asarray(ref),
                               rtol=5e-2, atol=5e-2)

    print("KERNEL_OK")
</pallas_src>

<mosaic_0001>
module attributes {stable_mosaic.version = 11 : i64} {
  func.func @critic_kernel(%arg0: i32, %arg1: memref<8x33xf32, #tpu.memory_space<vmem>>, %arg2: memref<8x4xf32, #tpu.memory_space<vmem>>, %arg3: memref<33x256xf32, #tpu.memory_space<vmem>>, %arg4: memref<1x256xf32, #tpu.memory_space<vmem>>, %arg5: memref<256x128xf32, #tpu.memory_space<vmem>>, %arg6: memref<4x128xf32, #tpu.memory_space<vmem>>, %arg7: memref<1x128xf32, #tpu.memory_space<vmem>>, %arg8: memref<1x128xf32, #tpu.memory_space<vmem>>, %arg9: memref<1x1xf32, #tpu.memory_space<vmem>>, %arg10: memref<8x1xf32, #tpu.memory_space<vmem>>) attributes {dimension_semantics = [#tpu.dimension_semantics<parallel>], iteration_bounds = array<i64: 1>, scalar_prefetch = 0 : i64, scratch_operands = 0 : i64, tpu.core_type = #tpu.core_type<tc>, window_params = [{transform_indices = @transform_0, window_bounds = array<i64: 8, 33>}, {transform_indices = @transform_1, window_bounds = array<i64: 8, 4>}, {pipeline_mode = #tpu.pipeline_mode<synchronous>, transform_indices = @transform_2, window_bounds = array<i64: 33, 256>}, {pipeline_mode = #tpu.pipeline_mode<synchronous>, transform_indices = @transform_3, window_bounds = array<i64: 1, 256>}, {pipeline_mode = #tpu.pipeline_mode<synchronous>, transform_indices = @transform_4, window_bounds = array<i64: 256, 128>}, {pipeline_mode = #tpu.pipeline_mode<synchronous>, transform_indices = @transform_5, window_bounds = array<i64: 4, 128>}, {pipeline_mode = #tpu.pipeline_mode<synchronous>, transform_indices = @transform_6, window_bounds = array<i64: 1, 128>}, {pipeline_mode = #tpu.pipeline_mode<synchronous>, transform_indices = @transform_7, window_bounds = array<i64: 1, 128>}, {pipeline_mode = #tpu.pipeline_mode<synchronous>, transform_indices = @transform_8, window_bounds = array<i64: 1, 1>}, {transform_indices = @transform_9, window_bounds = array<i64: 8, 1>}]} {
    %c0 = arith.constant 0 : index
    %c0_0 = arith.constant 0 : index
    %0 = vector.load %arg1[%c0, %c0_0] : memref<8x33xf32, #tpu.memory_space<vmem>>, vector<8x33xf32>
    %c0_1 = arith.constant 0 : index
    %c0_2 = arith.constant 0 : index
    %1 = vector.load %arg3[%c0_1, %c0_2] : memref<33x256xf32, #tpu.memory_space<vmem>>, vector<33x256xf32>
    %cst = arith.constant dense<0.000000e+00> : vector<8x256xf32>
    %2 = tpu.matmul %0, %1, %cst {dimension_numbers = #tpu.dot_dimension_numbers<[1], [0], [0], [1], [0, 0, 1, 1], [], []>} : vector<8x33xf32>, vector<33x256xf32>, vector<8x256xf32> -> vector<8x256xf32>
    %c0_3 = arith.constant 0 : index
    %c0_4 = arith.constant 0 : index
    %3 = vector.load %arg4[%c0_3, %c0_4] : memref<1x256xf32, #tpu.memory_space<vmem>>, vector<1x256xf32>
    %4 = vector.broadcast %3 : vector<1x256xf32> to vector<8x256xf32>
    %5 = arith.addf %2, %4 : vector<8x256xf32>
    %cst_5 = arith.constant 0.000000e+00 : f32
    %6 = vector.broadcast %cst_5 : f32 to vector<8x256xf32>
    %7 = arith.maximumf %5, %6 : vector<8x256xf32>
    %c0_6 = arith.constant 0 : index
    %c0_7 = arith.constant 0 : index
    %8 = vector.load %arg5[%c0_6, %c0_7] : memref<256x128xf32, #tpu.memory_space<vmem>>, vector<256x128xf32>
    %cst_8 = arith.constant dense<0.000000e+00> : vector<8x128xf32>
    %9 = tpu.matmul %7, %8, %cst_8 {dimension_numbers = #tpu.dot_dimension_numbers<[1], [0], [0], [1], [0, 0, 1, 1], [], []>} : vector<8x256xf32>, vector<256x128xf32>, vector<8x128xf32> -> vector<8x128xf32>
    %c0_9 = arith.constant 0 : index
    %c0_10 = arith.constant 0 : index
    %10 = vector.load %arg2[%c0_9, %c0_10] : memref<8x4xf32, #tpu.memory_space<vmem>>, vector<8x4xf32>
    %c0_11 = arith.constant 0 : index
    %c0_12 = arith.constant 0 : index
    %11 = vector.load %arg6[%c0_11, %c0_12] : memref<4x128xf32, #tpu.memory_space<vmem>>, vector<4x128xf32>
    %cst_13 = arith.constant dense<0.000000e+00> : vector<8x128xf32>
    %12 = tpu.matmul %10, %11, %cst_13 {dimension_numbers = #tpu.dot_dimension_numbers<[1], [0], [0], [1], [0, 0, 1, 1], [], []>} : vector<8x4xf32>, vector<4x128xf32>, vector<8x128xf32> -> vector<8x128xf32>
    %13 = arith.addf %9, %12 : vector<8x128xf32>
    %c0_14 = arith.constant 0 : index
    %c0_15 = arith.constant 0 : index
    %14 = vector.load %arg7[%c0_14, %c0_15] : memref<1x128xf32, #tpu.memory_space<vmem>>, vector<1x128xf32>
    %15 = vector.broadcast %14 : vector<1x128xf32> to vector<8x128xf32>
    %16 = arith.addf %13, %15 : vector<8x128xf32>
    %cst_16 = arith.constant 0.000000e+00 : f32
    %17 = vector.broadcast %cst_16 : f32 to vector<8x128xf32>
    %18 = arith.maximumf %16, %17 : vector<8x128xf32>
    %c0_17 = arith.constant 0 : index
    %c0_18 = arith.constant 0 : index
    %19 = vector.load %arg8[%c0_17, %c0_18] : memref<1x128xf32, #tpu.memory_space<vmem>>, vector<1x128xf32>
    %20 = vector.broadcast %19 : vector<1x128xf32> to vector<8x128xf32>
    %21 = arith.mulf %18, %20 : vector<8x128xf32>
    %cst_19 = arith.constant dense<0.000000e+00> : vector<8xf32>
    %22 = vector.multi_reduction <add>, %21, %cst_19 [1] : vector<8x128xf32> to vector<8xf32>
    %23 = vector.shape_cast %22 : vector<8xf32> to vector<8x1xf32>
    %c0_20 = arith.constant 0 : index
    %c0_21 = arith.constant 0 : index
    %24 = vector.load %arg9[%c0_20, %c0_21] : memref<1x1xf32, #tpu.memory_space<vmem>>, vector<1x1xf32>
    %25 = vector.broadcast %24 : vector<1x1xf32> to vector<8x1xf32>
    %26 = arith.addf %23, %25 : vector<8x1xf32>
    %c0_22 = arith.constant 0 : index
    %c0_23 = arith.constant 0 : index
    %27 = vector.load %arg10[%c0_22, %c0_23] : memref<8x1xf32, #tpu.memory_space<vmem>>, vector<8x1xf32>
    tpu.vector_store %arg10[%c0_22, %c0_23], %26 {strides = array<i32>} : memref<8x1xf32, #tpu.memory_space<vmem>>, vector<8x1xf32>,
    return
  }
  func.func @transform_0(%arg0: i32) -> (i32, i32) {
    %c0_i32 = arith.constant 0 : i32
    %c0_i32_0 = arith.constant 0 : i32
    return %arg0, %c0_i32 : i32, i32
  }
  func.func @transform_1(%arg0: i32) -> (i32, i32) {
    %c0_i32 = arith.constant 0 : i32
    %c0_i32_0 = arith.constant 0 : i32
    return %arg0, %c0_i32 : i32, i32
  }
  func.func @transform_2(%arg0: i32) -> (i32, i32) {
    %c0_i32 = arith.constant 0 : i32
    %c0_i32_0 = arith.constant 0 : i32
    %c0_i32_1 = arith.constant 0 : i32
    return %c0_i32, %c0_i32_0 : i32, i32
  }
  func.func @transform_3(%arg0: i32) -> (i32, i32) {
    %c0_i32 = arith.constant 0 : i32
    %c0_i32_0 = arith.constant 0 : i32
    %c0_i32_1 = arith.constant 0 : i32
    return %c0_i32, %c0_i32_0 : i32, i32
  }
  func.func @transform_4(%arg0: i32) -> (i32, i32) {
    %c0_i32 = arith.constant 0 : i32
    %c0_i32_0 = arith.constant 0 : i32
    %c0_i32_1 = arith.constant 0 : i32
    return %c0_i32, %c0_i32_0 : i32, i32
  }
  func.func @transform_5(%arg0: i32) -> (i32, i32) {
    %c0_i32 = arith.constant 0 : i32
    %c0_i32_0 = arith.constant 0 : i32
    %c0_i32_1 = arith.constant 0 : i32
    return %c0_i32, %c0_i32_0 : i32, i32
  }
  func.func @transform_6(%arg0: i32) -> (i32, i32) {
    %c0_i32 = arith.constant 0 : i32
    %c0_i32_0 = arith.constant 0 : i32
    %c0_i32_1 = arith.constant 0 : i32
    return %c0_i32, %c0_i32_0 : i32, i32
  }
  func.func @transform_7(%arg0: i32) -> (i32, i32) {
    %c0_i32 = arith.constant 0 : i32
    %c0_i32_0 = arith.constant 0 : i32
    %c0_i32_1 = arith.constant 0 : i32
    return %c0_i32, %c0_i32_0 : i32, i32
  }
  func.func @transform_8(%arg0: i32) -> (i32, i32) {
    %c0_i32 = arith.constant 0 : i32
    %c0_i32_0 = arith.constant 0 : i32
    %c0_i32_1 = arith.constant 0 : i32
    return %c0_i32, %c0_i32_0 : i32, i32
  }
  func.func @transform_9(%arg0: i32) -> (i32, i32) {
    %c0_i32 = arith.constant 0 : i32
    %c0_i32_0 = arith.constant 0 : i32
    return %arg0, %c0_i32 : i32, i32
  }
}

</mosaic_0001>

<llo_original>
// kernel: critic_forward.1
$region0: #{critic_forward.1}
  #allocation0 [shape = 'u32[]', space=smem, size = 0x4, offset = 0x4, fixed_abs, tag = 'smem constant byte address 0x4 - core index']
  #allocation1 [shape = 'u32[144,128]{1,0:T(1,128)}', space=vmem, size = 0x12000, scoped, tag = 'internal scratch']
  #allocation2 [shape = 'f32[1,1]{1,0:T(1,128)S(1)}', space=vmem, size = 0x200, scoped, tag = 'scoped memory for critic_forward.1']
  %s0 = inlined_call_operand.vmem [shape: f32[8,33], index: 0, kind: input, shape index: {}]
  %s1 = inlined_call_operand.vmem [shape: f32[8,4], index: 1, kind: input, shape index: {}]
  %s2 = inlined_call_operand.hbm [shape: f32[33,256], index: 2, kind: input, shape index: {}]
  %s3 = inlined_call_operand.vmem [shape: f32[1,256], index: 3, kind: input, shape index: {}]
  %s4 = inlined_call_operand.hbm [shape: f32[256,128], index: 4, kind: input, shape index: {}]
  %s5 = inlined_call_operand.vmem [shape: f32[4,128], index: 5, kind: input, shape index: {}]
  %s6 = inlined_call_operand.vmem [shape: f32[1,128], index: 6, kind: input, shape index: {}]
  %s7 = inlined_call_operand.vmem [shape: f32[1,128], index: 7, kind: input, shape index: {}]
  %s8 = inlined_call_operand.<no memory space> [shape: f32[1,1], index: 8, kind: input, shape index: {}]
  %s9 = inlined_call_operand.vmem [shape: f32[8,1], index: 9, kind: output, shape index: {}]
  %s10 = sld [smem:[#allocation0]]
  $region54: #{critic_forward.1} parent=0
    _
  %s12 = ssub.s32 1, %s10
  %s13 = scalar_select 0, %s12, %s10
  %v14 = vstv %s8
  %15 = vst [vmem:[#allocation2] sm:$0x1] %v14
  $region1: #{critic_forward.1} parent=0
    #allocation3 [shape = 'u8[40960]{0}', space=vmem, size = 0xa000, scoped, tag = 'input window, operand 2, single buffered']
    #allocation4 [shape = 's32[1]{0}', space=sflag, size = 0x4, scoped, tag = 'scoped memory for critic_forward.1']
    #allocation5 [shape = 'u8[131072]{0}', space=vmem, size = 0x20000, scoped, tag = 'input window, operand 4, single buffered']
    #allocation6 [shape = 's32[1]{0}', space=sflag, size = 0x4, scoped, tag = 'scoped memory for critic_forward.1']
    %16 = vsyncpa [#allocation4], 0
    %17 = vsyncpa [#allocation6], 0
    // Predicated region
    $region2: #{critic_forward.1} parent=1 // pred_check
      _
    $region3: #{critic_forward.1} parent=1 // pred_check_branch
      %19 = sbr.rel (0) target = $region5
    $region4: #{critic_forward.1} parent=1 // pred_region
      _
    $region5: #{critic_forward.1} parent=1 // pred_fallthru
      _
    // Predicated region
    $region6: #{critic_forward.1} parent=1 // pred_check
      _
    $region7: #{critic_forward.1} parent=1 // pred_check_branch
      %21 = sbr.rel (0) target = $region9
    $region8: #{critic_forward.1} parent=1 // pred_region
      _
    $region9: #{critic_forward.1} parent=1 // pred_fallthru
      _
    // Predicated region
    $region10: #{critic_forward.1} parent=1 // pred_check
      _
    $region11: #{critic_forward.1} parent=1 // pred_check_branch
      %23 = sbr.rel (0) target = $region13
    $region12: #{critic_forward.1} parent=1 // pred_region
      %s25 = ssub.s32 1280, 1280
      %26 = vsyncadd [#allocation4], %s25
      %s27 = sshll.u32 [#allocation3], 4
      %s28 = int_to_ptr.vmem [resolvable:$true] %s27
      %33 = dma.hbm_to_vmem [thread:$0]  %s2, 1280, %s28, [#allocation4], 256, 256, 16
    $region13: #{critic_forward.1} parent=1 // pred_fallthru
      _
    // Predicated region
    $region14: #{critic_forward.1} parent=1 // pred_check
      _
    $region15: #{critic_forward.1} parent=1 // pred_check_branch
      %35 = sbr.rel (0) target = $region17
    $region16: #{critic_forward.1} parent=1 // pred_region
      _
    $region17: #{critic_forward.1} parent=1 // pred_fallthru
      _
    // Predicated region
    $region18: #{critic_forward.1} parent=1 // pred_check
      _
    $region19: #{critic_forward.1} parent=1 // pred_check_branch
      %37 = sbr.rel (0) target = $region21
    $region20: #{critic_forward.1} parent=1 // pred_region
      %s39 = ssub.s32 4096, 4096
      %40 = vsyncadd [#allocation6], %s39
      %s41 = sshll.u32 [#allocation5], 4
      %s42 = int_to_ptr.vmem [resolvable:$true] %s41
      %47 = dma.hbm_to_vmem [thread:$0]  %s4, 4096, %s42, [#allocation6], 128, 128, 8
    $region21: #{critic_forward.1} parent=1 // pred_fallthru
      _
    // Predicated region
    $region22: #{critic_forward.1} parent=1 // pred_check
      _
    $region23: #{critic_forward.1} parent=1 // pred_check_branch
      %49 = sbr.rel (0) target = $region25
    $region24: #{critic_forward.1} parent=1 // pred_region
      _
    $region25: #{critic_forward.1} parent=1 // pred_fallthru
      _
    // Predicated region
    $region26: #{critic_forward.1} parent=1 // pred_check
      _
    $region27: #{critic_forward.1} parent=1 // pred_check_branch
      %51 = sbr.rel (0) target = $region29
    $region28: #{critic_forward.1} parent=1 // pred_region
      _
    $region29: #{critic_forward.1} parent=1 // pred_fallthru
      _
    // Predicated region
    $region30: #{critic_forward.1} parent=1 // pred_check
      _
    $region31: #{critic_forward.1} parent=1 // pred_check_branch
      %53 = sbr.rel (0) target = $region33
    $region32: #{critic_forward.1} parent=1 // pred_region
      _
    $region33: #{critic_forward.1} parent=1 // pred_fallthru
      _
    // Predicated region
    $region34: #{critic_forward.1} parent=1 // pred_check
      _
    $region35: #{critic_forward.1} parent=1 // pred_check_branch
      %55 = sbr.rel (0) target = $region37
    $region36: #{critic_forward.1} parent=1 // pred_region
      _
    $region37: #{critic_forward.1} parent=1 // pred_fallthru
      _
    // Predicated region
    $region38: #{critic_forward.1} parent=1 // pred_check
      _
    $region39: #{critic_forward.1} parent=1 // pred_check_branch
      %57 = sbr.rel (0) target = $region41
    $region40: #{critic_forward.1} parent=1 // pred_region
      %58 = dma.done [#allocation4], 1280
    $region41: #{critic_forward.1} parent=1 // pred_fallthru
      _
    // Predicated region
    $region42: #{critic_forward.1} parent=1 // pred_check
      _
    $region43: #{critic_forward.1} parent=1 // pred_check_branch
      %60 = sbr.rel (0) target = $region45
    $region44: #{critic_forward.1} parent=1 // pred_region
      %61 = dma.done [#allocation6], 4096
    $region45: #{critic_forward.1} parent=1 // pred_fallthru
      _
    %v62 = vld [vmem:[%s0] sm:$0xff]
    %v63 = vld [vmem:[#allocation3] sm:$0xff]
    %v64 = vld [vmem:[#allocation3 + $0x8] sm:$0xff]
    %v65 = vld [vmem:[#allocation3 + $0x10] sm:$0xff]
    %v66 = vld [vmem:[#allocation3 + $0x18] sm:$0xff]
    %v67 = vld [vmem:[#allocation3 + $0x20] sm:$0xff]
    %v68 = vld [vmem:[#allocation3 + $0x28] sm:$0xff]
    %v69 = vld [vmem:[#allocation3 + $0x30] sm:$0xff]
    %v70 = vld [vmem:[#allocation3 + $0x38] sm:$0xff]
    %v71 = vld [vmem:[#allocation3 + $0x40] sm:$0x1]
    %v72 = vld [vmem:[#allocation3 + $0x48] sm:$0x1]
    %v73 = vld [vmem:[%s3] sm:$0x3]
    %v75 = vlaneseq
    %v76 = vshrl.u32 %v75, 7
    %v77 = vsub.s32 0, %v76
    %v78 = vrot.slane %v73, %v77
    %v79 = vlaneseq
    %v80 = vshrl.u32 %v79, 7
    %v81 = vsub.s32 1, %v80
    %v82 = vrot.slane %v73, %v81
    %vm85 = vcmask 269312
    %v87 = vsel %vm85, %v62, 0
    %vm89 = vcmask 1040384
    %v91 = vsel %vm89, %v71, 0
    %v94 = vsel %vm89, %v72, 0
    %96 = vmatprep.subr.mxu0 0.0
    %97 = vmatpush1.msra.mxu0 0.0
    %98 = vmatprep.subr.mxu0 0.0
    %99 = vmatpush1.msra.mxu0 0.0
    %100 = vmatprep.subr.mxu0 0.0
    %101 = vmatpush1.msra.mxu0 0.0
    %102 = vmatprep.subr.mxu0 0.0
    %103 = vmatpush1.msra.mxu0 0.0
    %104 = vmatprep.subr.mxu0 0.0
    %105 = vmatpush1.msra.mxu0 0.0
    %106 = vmatprep.subr.mxu0 0.0
    %107 = vmatpush1.msra.mxu0 0.0
    %108 = vmatprep.subr.mxu0 0.0
    %109 = vmatpush1.msra.mxu0 0.0
    %110 = vmatprep.subr.mxu0 0.0
    %111 = vmatpush1.msra.mxu0 0.0
    %112 = vmatprep.subr.mxu0 0.0
    %113 = vmatpush1.msra.mxu0 0.0
    %114 = vmatprep.subr.mxu0 0.0
    %115 = vmatpush1.msra.mxu0 0.0
    %116 = vmatprep.subr.mxu0 0.0
    %117 = vmatpush1.msra.mxu0 0.0
    %118 = vmatprep.subr.mxu0 %v94
    %119 = vmatpush1.msra.mxu0 %v91
    %120 = vmatprep.subr.mxu0 %v70
    %121 = vmatpush1.msra.mxu0 %v69
    %122 = vmatprep.subr.mxu0 %v68
    %123 = vmatpush1.msra.mxu0 %v67
    %124 = vmatprep.subr.mxu0 %v66
    %125 = vmatpush1.msra.mxu0 %v65
    %126 = vmatprep.subr.mxu0 %v64
    %127 = vmatpush1.msra.mxu0 %v63
    %128 = vmatprep.subr.mxu0 0.0
    %129 = vmatpush2.msra.mxu0 0.0
    %130 = vmatprep.subr.mxu0 0.0
    %131 = vmatpush2.msra.mxu0 0.0
    %132 = vmatprep.subr.mxu0 0.0
    %133 = vmatpush2.msra.mxu0 0.0
    %134 = vmatprep.subr.mxu0 0.0
    %135 = vmatpush2.msra.mxu0 0.0
    %136 = vmatprep.subr.mxu0 0.0
    %137 = vmatpush2.msra.mxu0 0.0
    %138 = vmatprep.subr.mxu0 0.0
    %139 = vmatpush2.msra.mxu0 0.0
    %140 = vmatprep.subr.mxu0 0.0
    %141 = vmatpush2.msra.mxu0 0.0
    %142 = vmatprep.subr.mxu0 0.0
    %143 = vmatpush2.msra.mxu0 0.0
    %144 = vmatprep.subr.mxu0 0.0
    %145 = vmatpush2.msra.mxu0 0.0
    %146 = vmatprep.subr.mxu0 0.0
    %147 = vmatpush2.msra.mxu0 0.0
    %148 = vmatprep.subr.mxu0 0.0
    %149 = vmatpush2.msra.mxu0 0.0
    %150 = vmatprep.subr.mxu0 0.0
    %151 = vmatpush2.msra.mxu0 0.0
    %152 = vmatprep.subr.mxu0 0.0
    %153 = vmatpush2.msra.mxu0 0.0
    %154 = vmatprep.subr.mxu0 0.0
    %155 = vmatpush2.msra.mxu0 0.0
    %156 = vmatprep.subr.mxu0 0.0
    %157 = vmatpush2.msra.mxu0 0.0
    %158 = vmatprep.subr.mxu0 0.0
    %159 = vmatpush2.msra.mxu0 0.0
    %160 = vmatprep.mubr.f32.mxu0 0.0
    %161 = vmatmul.mubr.f32.gmra.mxu0 %v87
    %v162 = vpop.f32.mrf.mxu0
    %v163 = vadd.f32 %v78, %v162
    %v164 = vpop.f32.mrf.mxu0
    %v165 = vadd.f32 %v82, %v164
    %166 = vdwg.mxu0
    %v167 = vmax.f32 %v163, 0.0
    %v168 = vmax.f32 %v165, 0.0
    %v169 = vld [vmem:[#allocation5] sm:$0xff]
    %v170 = vld [vmem:[#allocation5 + $0x8] sm:$0xff]
    %v171 = vld [vmem:[#allocation5 + $0x10] sm:$0xff]
    %v172 = vld [vmem:[#allocation5 + $0x18] sm:$0xff]
    %v173 = vld [vmem:[#allocation5 + $0x20] sm:$0xff]
    %v174 = vld [vmem:[#allocation5 + $0x28] sm:$0xff]
    %v175 = vld [vmem:[#allocation5 + $0x30] sm:$0xff]
    %v176 = vld [vmem:[#allocation5 + $0x38] sm:$0xff]
    %v177 = vld [vmem:[#allocation5 + $0x40] sm:$0xff]
    %v178 = vld [vmem:[#allocation5 + $0x48] sm:$0xff]
    %v179 = vld [vmem:[#allocation5 + $0x50] sm:$0xff]
    %v180 = vld [vmem:[#allocation5 + $0x58] sm:$0xff]
    %v181 = vld [vmem:[#allocation5 + $0x60] sm:$0xff]
    %v182 = vld [vmem:[#allocation5 + $0x68] sm:$0xff]
    %v183 = vld [vmem:[#allocation5 + $0x70] sm:$0xff]
    %v184 = vld [vmem:[#allocation5 + $0x78] sm:$0xff]
    %v185 = vld [vmem:[#allocation5 + $0x80] sm:$0xff]
    %v186 = vld [vmem:[#allocation5 + $0x88] sm:$0xff]
    %v187 = vld [vmem:[#allocation5 + $0x90] sm:$0xff]
    %v188 = vld [vmem:[#allocation5 + $0x98] sm:$0xff]
    %v189 = vld [vmem:[#allocation5 + $0xa0] sm:$0xff]
    %v190 = vld [vmem:[#allocation5 + $0xa8] sm:$0xff]
    %v191 = vld [vmem:[#allocation5 + $0xb0] sm:$0xff]
    %v192 = vld [vmem:[#allocation5 + $0xb8] sm:$0xff]
    %v193 = vld [vmem:[#allocation5 + $0xc0] sm:$0xff]
    %v194 = vld [vmem:[#allocation5 + $0xc8] sm:$0xff]
    %v195 = vld [vmem:[#allocation5 + $0xd0] sm:$0xff]
    %v196 = vld [vmem:[#allocation5 + $0xd8] sm:$0xff]
    %v197 = vld [vmem:[#allocation5 + $0xe0] sm:$0xff]
    %v198 = vld [vmem:[#allocation5 + $0xe8] sm:$0xff]
    %v199 = vld [vmem:[#allocation5 + $0xf0] sm:$0xff]
    %v200 = vld [vmem:[#allocation5 + $0xf8] sm:$0xff]
    %v201 = vld [vmem:[%s1] sm:$0xff]
    %v202 = vld [vmem:[%s5] sm:$0xf]
    %vm203 = vcmask 31744
    %v205 = vsel %vm203, %v201, 0
    %vm207 = vcmask 1043456
    %v209 = vsel %vm207, %v202, 0
    %211 = vmatprep.subr.mxu0 0.0
    %212 = vmatpush1.msra.mxu0 0.0
    %213 = vmatprep.subr.mxu0 0.0
    %214 = vmatpush1.msra.mxu0 0.0
    %215 = vmatprep.subr.mxu0 0.0
    %216 = vmatpush1.msra.mxu0 0.0
    %217 = vmatprep.subr.mxu0 0.0
    %218 = vmatpush1.msra.mxu0 0.0
    %219 = vmatprep.subr.mxu0 0.0
    %220 = vmatpush1.msra.mxu0 0.0
    %221 = vmatprep.subr.mxu0 0.0
    %222 = vmatpush1.msra.mxu0 0.0
    %223 = vmatprep.subr.mxu0 0.0
    %224 = vmatpush1.msra.mxu0 0.0
    %225 = vmatprep.subr.mxu0 0.0
    %226 = vmatpush1.msra.mxu0 0.0
    %227 = vmatprep.subr.mxu0 0.0
    %228 = vmatpush1.msra.mxu0 0.0
    %229 = vmatprep.subr.mxu0 0.0
    %230 = vmatpush1.msra.mxu0 0.0
    %231 = vmatprep.subr.mxu0 0.0
    %232 = vmatpush1.msra.mxu0 0.0
    %233 = vmatprep.subr.mxu0 0.0
    %234 = vmatpush1.msra.mxu0 0.0
    %235 = vmatprep.subr.mxu0 0.0
    %236 = vmatpush1.msra.mxu0 0.0
    %237 = vmatprep.subr.mxu0 0.0
    %238 = vmatpush1.msra.mxu0 0.0
    %239 = vmatprep.subr.mxu0 0.0
    %240 = vmatpush1.msra.mxu0 0.0
    %241 = vmatprep.subr.mxu0 0.0
    %242 = vmatpush1.msra.mxu0 %v209
    %243 = vmatprep.subr.mxu0 0.0
    %244 = vmatpush2.msra.mxu0 0.0
    %245 = vmatprep.subr.mxu0 0.0
    %246 = vmatpush2.msra.mxu0 0.0
    %247 = vmatprep.subr.mxu0 0.0
    %248 = vmatpush2.msra.mxu0 0.0
    %249 = vmatprep.subr.mxu0 0.0
    %250 = vmatpush2.msra.mxu0 0.0
    %251 = vmatprep.subr.mxu0 0.0
    %252 = vmatpush2.msra.mxu0 0.0
    %253 = vmatprep.subr.mxu0 0.0
    %254 = vmatpush2.msra.mxu0 0.0
    %255 = vmatprep.subr.mxu0 0.0
    %256 = vmatpush2.msra.mxu0 0.0
    %257 = vmatprep.subr.mxu0 0.0
    %258 = vmatpush2.msra.mxu0 0.0
    %259 = vmatprep.subr.mxu0 0.0
    %260 = vmatpush2.msra.mxu0 0.0
    %261 = vmatprep.subr.mxu0 0.0
    %262 = vmatpush2.msra.mxu0 0.0
    %263 = vmatprep.subr.mxu0 0.0
    %264 = vmatpush2.msra.mxu0 0.0
    %265 = vmatprep.subr.mxu0 0.0
    %266 = vmatpush2.msra.mxu0 0.0
    %267 = vmatprep.subr.mxu0 0.0
    %268 = vmatpush2.msra.mxu0 0.0
    %269 = vmatprep.subr.mxu0 0.0
    %270 = vmatpush2.msra.mxu0 0.0
    %271 = vmatprep.subr.mxu0 0.0
    %272 = vmatpush2.msra.mxu0 0.0
    %273 = vmatprep.subr.mxu0 0.0
    %274 = vmatpush2.msra.mxu0 0.0
    %275 = vmatprep.mubr.f32.mxu0 0.0
    %276 = vmatmul.mubr.f32.gmra.mxu0 %v205
    %v277 = vpop.f32.mrf.mxu0
    %v278 = vadd.f32 0.0, %v277
    %v279 = vpop.f32.mrf.mxu0
    %280 = vdwg.mxu0
    %281 = vmatprep.subr.mxu0 0.0
    %282 = vmatpush1.msra.mxu0 %v184
    %283 = vmatprep.subr.mxu0 0.0
    %284 = vmatpush1.msra.mxu0 %v183
    %285 = vmatprep.subr.mxu0 0.0
    %286 = vmatpush1.msra.mxu0 %v182
    %287 = vmatprep.subr.mxu0 0.0
    %288 = vmatpush1.msra.mxu0 %v181
    %289 = vmatprep.subr.mxu0 0.0
    %290 = vmatpush1.msra.mxu0 %v180
    %291 = vmatprep.subr.mxu0 0.0
    %292 = vmatpush1.msra.mxu0 %v179
    %293 = vmatprep.subr.mxu0 0.0
    %294 = vmatpush1.msra.mxu0 %v178
    %295 = vmatprep.subr.mxu0 0.0
    %296 = vmatpush1.msra.mxu0 %v177
    %297 = vmatprep.subr.mxu0 0.0
    %298 = vmatpush1.msra.mxu0 %v176
    %299 = vmatprep.subr.mxu0 0.0
    %300 = vmatpush1.msra.mxu0 %v175
    %301 = vmatprep.subr.mxu0 0.0
    %302 = vmatpush1.msra.mxu0 %v174
    %303 = vmatprep.subr.mxu0 0.0
    %304 = vmatpush1.msra.mxu0 %v173
    %305 = vmatprep.subr.mxu0 0.0
    %306 = vmatpush1.msra.mxu0 %v172
    %307 = vmatprep.subr.mxu0 0.0
    %308 = vmatpush1.msra.mxu0 %v171
    %309 = vmatprep.subr.mxu0 0.0
    %310 = vmatpush1.msra.mxu0 %v170
    %311 = vmatprep.subr.mxu0 0.0
    %312 = vmatpush1.msra.mxu0 %v169
    %313 = vmatprep.subr.mxu0 0.0
    %314 = vmatpush2.msra.mxu0 %v200
    %315 = vmatprep.subr.mxu0 0.0
    %316 = vmatpush2.msra.mxu0 %v199
    %317 = vmatprep.subr.mxu0 0.0
    %318 = vmatpush2.msra.mxu0 %v198
    %319 = vmatprep.subr.mxu0 0.0
    %320 = vmatpush2.msra.mxu0 %v197
    %321 = vmatprep.subr.mxu0 0.0
    %322 = vmatpush2.msra.mxu0 %v196
    %323 = vmatprep.subr.mxu0 0.0
    %324 = vmatpush2.msra.mxu0 %v195
    %325 = vmatprep.subr.mxu0 0.0
    %326 = vmatpush2.msra.mxu0 %v194
    %327 = vmatprep.subr.mxu0 0.0
    %328 = vmatpush2.msra.mxu0 %v193
    %329 = vmatprep.subr.mxu0 0.0
    %330 = vmatpush2.msra.mxu0 %v192
    %331 = vmatprep.subr.mxu0 0.0
    %332 = vmatpush2.msra.mxu0 %v191
    %333 = vmatprep.subr.mxu0 0.0
    %334 = vmatpush2.msra.mxu0 %v190
    %335 = vmatprep.subr.mxu0 0.0
    %336 = vmatpush2.msra.mxu0 %v189
    %337 = vmatprep.subr.mxu0 0.0
    %338 = vmatpush2.msra.mxu0 %v188
    %339 = vmatprep.subr.mxu0 0.0
    %340 = vmatpush2.msra.mxu0 %v187
    %341 = vmatprep.subr.mxu0 0.0
    %342 = vmatpush2.msra.mxu0 %v186
    %343 = vmatprep.subr.mxu0 0.0
    %344 = vmatpush2.msra.mxu0 %v185
    %345 = vmatprep.mubr.f32.mxu0 %v168
    %346 = vmatmul.mubr.f32.gmra.mxu0 %v167
    %v347 = vpop.f32.mrf.mxu0
    %v348 = vadd.f32 %v278, %v347
    %v349 = vpop.f32.mrf.mxu0
    %350 = vdwg.mxu0
    %v351 = vld [vmem:[%s6] sm:$0x1]
    %v353 = vlaneseq
    %v354 = vshrl.u32 %v353, 7
    %v355 = vsub.s32 0, %v354
    %v356 = vrot.slane %v351, %v355
    %v358 = vadd.f32 %v348, %v356
    %v359 = vmax.f32 %v358, 0.0
    %v360 = vld [vmem:[%s7] sm:$0x1]
    %v362 = vlaneseq
    %v363 = vshrl.u32 %v362, 7
    %v364 = vsub.s32 0, %v363
    %v365 = vrot.slane %v360, %v364
    %v367 = vmul.f32 %v359, %v365
    %368 = vadd.xlane.f32.xlu0 %v367
    %v369 = vpop.xlane.xlu0 %368
    %v370 = vld [vmem:[#allocation2] sm:$0x1]
    %v372 = vlaneseq
    %v373 = vshrl.u32 %v372, 7
    %v374 = vsub.s32 0, %v373
    %v375 = vrot.slane %v370, %v374
    %v377 = vadd.f32 %v369, %v375
    %vm378 = vcmask 7168
    %379 = vst.msk [vmem:[%s9] sm:$0xff] %vm378, %v377
    // Predicated region
    $region46: #{critic_forward.1} parent=1 // pred_check
      _
    $region47: #{critic_forward.1} parent=1 // pred_check_branch
      %381 = sbr.rel (0) target = $region49
    $region48: #{critic_forward.1} parent=1 // pred_region
      _
    $region49: #{critic_forward.1} parent=1 // pred_fallthru
      _
    // Predicated region
    $region50: #{critic_forward.1} parent=1 // pred_check
      _
    $region51: #{critic_forward.1} parent=1 // pred_check_branch
      %383 = sbr.rel (0) target = $region53
    $region52: #{critic_forward.1} parent=1 // pred_region
      _
    $region53: #{critic_forward.1} parent=1 // pred_fallthru
      _
    %384 = vsyncpa [#allocation4], 1
    %385 = vsyncpa [#allocation6], 1

</llo_original>
